<compile_context>
chip_gen: v7x
topology: tpu7x:2x2x1
jax: 0.10.0
libtpu: 0.0.40
codegen_flags: <defaults>
</compile_context>

<pallas_src>
import jax
import jax.numpy as jnp
from jax import lax
from jax.experimental import pallas as pl
from jax.experimental.pallas import tpu as pltpu

C1 = 0.01 ** 2
C2 = 0.03 ** 2

# Per-block budget for each pipelined x/y/out block.  A grid step keeps
# ~6 double-buffered I/O blocks plus ~14-16 live block-sized f32 temporaries
# in the kernel body, so worst-case VMEM ~ 22x this number (~24 MiB), which
# fits every generation (v5e/v6e 128 MiB, v7x 64 MiB) under the limit below.
_BLOCK_BYTES = 1 << 20
_VMEM_LIMIT = 48 * 1024 * 1024


def _shift(a, axis, delta, use_roll):
    """out[.., j, ..] = a[.., j - delta, ..] for in-range source indices.

    Positions whose source index falls outside the axis carry an arbitrary
    value (wrap-around with roll, duplicated edge with the slice+concat
    fallback); callers always overwrite them via the reflection masks.
    """
    n = a.shape[axis]
    if use_roll:
        return pltpu.roll(a, delta % n, axis)  # XLU rotate, no vld/vst traffic
    if delta > 0:
        fill = lax.slice_in_dim(a, 0, delta, axis=axis)
        body = lax.slice_in_dim(a, 0, n - delta, axis=axis)
        return jnp.concatenate([fill, body], axis=axis)
    d = -delta
    body = lax.slice_in_dim(a, d, n, axis=axis)
    fill = lax.slice_in_dim(a, n - d, n, axis=axis)
    return jnp.concatenate([body, fill], axis=axis)


def _ssim_from_pools(x, y, pool3):
    """Shared SSIM math given a 3x3 reflect mean-pool closure (4 pools)."""
    mu_x = pool3(x)
    mu_y = pool3(y)
    mu_xy = mu_x * mu_y
    mu_sq = mu_x * mu_x + mu_y * mu_y
    # sigma_x + sigma_y from a single pool: pool(x^2 + y^2) - (mu_x^2 + mu_y^2)
    sig_sum = pool3(x * x + y * y) - mu_sq
    sig_xy = pool3(x * y) - mu_xy
    ssim_n = (2.0 * mu_xy + C1) * (2.0 * sig_xy + C2)
    ssim_d = (mu_sq + C1) * (sig_sum + C2)
    # EUP reciprocal + one Newton step instead of a VALU divide.
    inv = pl.reciprocal(ssim_d, approx=True)
    inv = inv * (2.0 - ssim_d * inv)
    return jnp.clip((1.0 - ssim_n * inv) * 0.5, 0.0, 1.0)


def _make_flat_kernel(H, W, use_roll):
    """Kernel over (rows, H*W) blocks: every sublane row is one whole image
    flattened onto the lane axis (lane-dense loads/stores even when W << 128)."""

    def kernel(col_ref, x_ref, y_ref, o_ref):
        x = x_ref[...].astype(jnp.float32)
        y = y_ref[...].astype(jnp.float32)

        # Border masks, built exactly once per kernel invocation (hoisted out
        # of the pools; JAX does not CSE broadcasts).
        col = jnp.broadcast_to(col_ref[...], x.shape)
        idx = lax.broadcasted_iota(jnp.int32, x.shape, 1)
        col0 = col == 0
        colL = col == W - 1
        row0 = idx < W
        rowL = idx >= (H - 1) * W

        def pool3(a):
            # --- W axis: shifts by +-1 along the flattened lane axis -------
            l = _shift(a, 1, 1, use_roll)      # a[.., j-1]
            r = _shift(a, 1, -1, use_roll)     # a[.., j+1]
            l = jnp.where(col0, r, l)          # reflect: col -1 -> col 1
            r = jnp.where(colL, l, r)          # reflect: col W  -> col W-2
            pw = a + l + r
            # --- H axis: shifts by +-W (rows of the flattened image) -------
            u = _shift(pw, 1, W, use_roll)     # row above
            d = _shift(pw, 1, -W, use_roll)    # row below
            u = jnp.where(row0, d, u)          # reflect: row -1 -> row 1
            d = jnp.where(rowL, u, d)          # reflect: row H  -> row H-2
            return (pw + u + d) * (1.0 / 9.0)

        o_ref[...] = _ssim_from_pools(x, y, pool3).astype(o_ref.dtype)

    return kernel


def _make_big_kernel(H, W):
    """One-image-per-grid-step kernel on the native (H, W) layout; used when a
    fused 8-image flat block would not fit the VMEM budget (large images)."""
    roll_w = (W % 128 == 0)  # lane axis tile-aligned -> XLU roll
    # Sublane (H) shifts stay as slice+concat: sublane rotates are less
    # uniformly supported and sublane copies are comparatively cheap.

    def kernel(x_ref, y_ref, o_ref):
        x = x_ref[0].astype(jnp.float32)
        y = y_ref[0].astype(jnp.float32)

        col = lax.broadcasted_iota(jnp.int32, (H, W), 1)
        row = lax.broadcasted_iota(jnp.int32, (H, W), 0)
        col0 = col == 0
        colL = col == W - 1
        row0 = row == 0
        rowL = row == H - 1

        def pool3(a):
            l = _shift(a, 1, 1, roll_w)
            r = _shift(a, 1, -1, roll_w)
            l = jnp.where(col0, r, l)
            r = jnp.where(colL, l, r)
            pw = a + l + r
            u = _shift(pw, 0, 1, False)
            d = _shift(pw, 0, -1, False)
            u = jnp.where(row0, d, u)
            d = jnp.where(rowL, u, d)
            return (pw + u + d) * (1.0 / 9.0)

        o_ref[0] = _ssim_from_pools(x, y, pool3).astype(o_ref.dtype)

    return kernel


def _pick_rows(nc, row_bytes):
    """Images per flat block: a multiple of 8 (sublane tile) within the
    per-block VMEM budget, capped so the grid keeps >= 2 steps (both v7x
    TensorCores get work) whenever nc allows it.  nc itself (full dim) is the
    legal escape hatch for tiny batches."""
    b = max(8, (_BLOCK_BYTES // row_bytes) // 8 * 8)
    if nc > 8:
        half = -(-nc // 2)            # ceil(nc / 2)
        b = min(b, -(-half // 8) * 8)  # rounded up to a multiple of 8
    return nc if b >= nc else b


def _ssim_flat(x, y):
    N, C, H, W = x.shape
    NC, HW = N * C, H * W
    x2 = x.reshape(NC, HW)  # free reshapes (row-major contiguous)
    y2 = y.reshape(NC, HW)
    # Column index of every flattened position, precomputed host-side so the
    # kernel needs no vector integer div/mod.
    col = (jnp.arange(HW, dtype=jnp.int32) % W).reshape(1, HW)

    b = _pick_rows(NC, HW * max(x.dtype.itemsize, 4))
    grid = (pl.cdiv(NC, b),)
    use_roll = (HW % 128 == 0)

    out = pl.pallas_call(
        _make_flat_kernel(H, W, use_roll),
        out_shape=jax.ShapeDtypeStruct((NC, HW), x.dtype),
        grid_spec=pltpu.PrefetchScalarGridSpec(
            num_scalar_prefetch=0,
            grid=grid,
            in_specs=[
                pl.BlockSpec((1, HW), lambda i: (0, 0)),  # column indices
                pl.BlockSpec((b, HW), lambda i: (i, 0)),
                pl.BlockSpec((b, HW), lambda i: (i, 0)),
            ],
            out_specs=pl.BlockSpec((b, HW), lambda i: (i, 0)),
        ),
        compiler_params=pltpu.CompilerParams(
            dimension_semantics=("parallel",),
            vmem_limit_bytes=_VMEM_LIMIT,
        ),
    )(col, x2, y2)
    return out.reshape(N, C, H, W)


def _ssim_big(x, y):
    N, C, H, W = x.shape
    NC = N * C
    x3 = x.reshape(NC, H, W)
    y3 = y.reshape(NC, H, W)

    out = pl.pallas_call(
        _make_big_kernel(H, W),
        out_shape=jax.ShapeDtypeStruct((NC, H, W), x.dtype),
        grid_spec=pltpu.PrefetchScalarGridSpec(
            num_scalar_prefetch=0,
            grid=(NC,),
            in_specs=[
                pl.BlockSpec((1, H, W), lambda i: (i, 0, 0)),
                pl.BlockSpec((1, H, W), lambda i: (i, 0, 0)),
            ],
            out_specs=pl.BlockSpec((1, H, W), lambda i: (i, 0, 0)),
        ),
        compiler_params=pltpu.CompilerParams(
            dimension_semantics=("parallel",),
            vmem_limit_bytes=_VMEM_LIMIT,
        ),
    )(x3, y3)
    return out.reshape(N, C, H, W)


def ssim_pallas(x, y):
    """SSIM loss map.  x, y: (N, C, H, W).  Returns (N, C, H, W)."""
    if x.ndim != 4 or x.shape != y.shape:
        raise ValueError("expected matching (N, C, H, W) inputs")
    N, C, H, W = x.shape
    if H < 2 or W < 2:
        raise ValueError("reflection pad of 1 needs H >= 2 and W >= 2")
    # f32 temporaries dominate the in-kernel footprint regardless of I/O dtype.
    if 8 * H * W * 4 <= _BLOCK_BYTES:
        return _ssim_flat(x, y)   # lane-dense fused-batch path
    return _ssim_big(x, y)        # one image per grid step


# ----------------------------- self-test -----------------------------------
def _reference(x, y):
    H, W = x.shape[-2:]
    xp = jnp.pad(x, ((0, 0), (0, 0), (1, 1), (1, 1)), mode="reflect")
    yp = jnp.pad(y, ((0, 0), (0, 0), (1, 1), (1, 1)), mode="reflect")

    def pool3(a):
        s = a[..., 0:H, 0:W]
        for di in range(3):
            for dj in range(3):
                if di == 0 and dj == 0:
                    continue
                s = s + a[..., di:di + H, dj:dj + W]
        return s / 9.0

    mu_x = pool3(xp)
    mu_y = pool3(yp)
    sx = pool3(xp * xp) - mu_x ** 2
    sy = pool3(yp * yp) - mu_y ** 2
    sxy = pool3(xp * yp) - mu_x * mu_y
    n = (2 * mu_x * mu_y + C1) * (2 * sxy + C2)
    d = (mu_x ** 2 + mu_y ** 2 + C1) * (sx + sy + C2)
    return jnp.clip((1 - n / d) / 2, 0.0, 1.0)


if __name__ == "__main__":
    root = jax.random.PRNGKey(0)

    def check(shape, key):
        kx, ky = jax.random.split(key)
        x = jax.random.uniform(kx, shape, dtype=jnp.float32)
        y = jax.random.uniform(ky, shape, dtype=jnp.float32)
        out = jax.block_until_ready(ssim_pallas(x, y))
        ref = _reference(x, y)
        assert out.shape == x.shape
        err = float(jnp.max(jnp.abs(out - ref)))
        assert err < 1e-5, f"max abs error {err} at shape {shape}"

    k1, k2 = jax.random.split(root)
    check((2, 4, 16, 16), k1)    # small images -> flat lane-dense path
    check((1, 2, 64, 640), k2)   # large images -> one-(H,W)-image-per-step path
    print("KERNEL_OK")
</pallas_src>

<mosaic_0001>
module attributes {stable_mosaic.version = 11 : i64} {
  func.func @kernel(%arg0: i32, %arg1: memref<1x256xi32, #tpu.memory_space<vmem>>, %arg2: memref<8x256xf32, #tpu.memory_space<vmem>>, %arg3: memref<8x256xf32, #tpu.memory_space<vmem>>, %arg4: memref<8x256xf32, #tpu.memory_space<vmem>>) attributes {dimension_semantics = [#tpu.dimension_semantics<parallel>], iteration_bounds = array<i64: 1>, scalar_prefetch = 0 : i64, scratch_operands = 0 : i64, tpu.core_type = #tpu.core_type<tc>, window_params = [{pipeline_mode = #tpu.pipeline_mode<synchronous>, transform_indices = @transform_0, window_bounds = array<i64: 1, 256>}, {transform_indices = @transform_1, window_bounds = array<i64: 8, 256>}, {transform_indices = @transform_2, window_bounds = array<i64: 8, 256>}, {transform_indices = @transform_3, window_bounds = array<i64: 8, 256>}]} {
    %c0 = arith.constant 0 : index
    %c0_0 = arith.constant 0 : index
    %0 = vector.load %arg2[%c0, %c0_0] : memref<8x256xf32, #tpu.memory_space<vmem>>, vector<8x256xf32>
    %c0_1 = arith.constant 0 : index
    %c0_2 = arith.constant 0 : index
    %1 = vector.load %arg3[%c0_1, %c0_2] : memref<8x256xf32, #tpu.memory_space<vmem>>, vector<8x256xf32>
    %c0_3 = arith.constant 0 : index
    %c0_4 = arith.constant 0 : index
    %2 = vector.load %arg1[%c0_3, %c0_4] : memref<1x256xi32, #tpu.memory_space<vmem>>, vector<1x256xi32>
    %3 = vector.shape_cast %2 : vector<1x256xi32> to vector<1x256xi32>
    %4 = vector.broadcast %3 : vector<1x256xi32> to vector<8x256xi32>
    %5 = tpu.iota {dimensions = array<i32: 1>} : vector<8x256xi32>
    %c0_i32 = arith.constant 0 : i32
    %6 = vector.broadcast %c0_i32 : i32 to vector<8x256xi32>
    %7 = arith.cmpi eq, %4, %6 : vector<8x256xi32>
    %c15_i32 = arith.constant 15 : i32
    %8 = vector.broadcast %c15_i32 : i32 to vector<8x256xi32>
    %9 = arith.cmpi eq, %4, %8 : vector<8x256xi32>
    %c16_i32 = arith.constant 16 : i32
    %10 = vector.broadcast %c16_i32 : i32 to vector<8x256xi32>
    %11 = arith.cmpi slt, %5, %10 : vector<8x256xi32>
    %c240_i32 = arith.constant 240 : i32
    %12 = vector.broadcast %c240_i32 : i32 to vector<8x256xi32>
    %13 = arith.cmpi sge, %5, %12 : vector<8x256xi32>
    %c1_i32 = arith.constant 1 : i32
    %14 = tpu.dynamic_rotate %0 by %c1_i32 dim 1 : vector<8x256xf32>, i32 -> vector<8x256xf32>
    %c255_i32 = arith.constant 255 : i32
    %15 = tpu.dynamic_rotate %0 by %c255_i32 dim 1 : vector<8x256xf32>, i32 -> vector<8x256xf32>
    %16 = arith.select %7, %15, %14 : vector<8x256xi1>, vector<8x256xf32>
    %17 = arith.select %9, %16, %15 : vector<8x256xi1>, vector<8x256xf32>
    %18 = arith.addf %0, %16 : vector<8x256xf32>
    %19 = arith.addf %18, %17 : vector<8x256xf32>
    %c16_i32_5 = arith.constant 16 : i32
    %20 = tpu.dynamic_rotate %19 by %c16_i32_5 dim 1 : vector<8x256xf32>, i32 -> vector<8x256xf32>
    %c240_i32_6 = arith.constant 240 : i32
    %21 = tpu.dynamic_rotate %19 by %c240_i32_6 dim 1 : vector<8x256xf32>, i32 -> vector<8x256xf32>
    %22 = arith.select %11, %21, %20 : vector<8x256xi1>, vector<8x256xf32>
    %23 = arith.select %13, %22, %21 : vector<8x256xi1>, vector<8x256xf32>
    %24 = arith.addf %19, %22 : vector<8x256xf32>
    %25 = arith.addf %24, %23 : vector<8x256xf32>
    %cst = arith.constant 0.111111112 : f32
    %26 = vector.broadcast %cst : f32 to vector<8x256xf32>
    %27 = arith.mulf %25, %26 : vector<8x256xf32>
    %c1_i32_7 = arith.constant 1 : i32
    %28 = tpu.dynamic_rotate %1 by %c1_i32_7 dim 1 : vector<8x256xf32>, i32 -> vector<8x256xf32>
    %c255_i32_8 = arith.constant 255 : i32
    %29 = tpu.dynamic_rotate %1 by %c255_i32_8 dim 1 : vector<8x256xf32>, i32 -> vector<8x256xf32>
    %30 = arith.select %7, %29, %28 : vector<8x256xi1>, vector<8x256xf32>
    %31 = arith.select %9, %30, %29 : vector<8x256xi1>, vector<8x256xf32>
    %32 = arith.addf %1, %30 : vector<8x256xf32>
    %33 = arith.addf %32, %31 : vector<8x256xf32>
    %c16_i32_9 = arith.constant 16 : i32
    %34 = tpu.dynamic_rotate %33 by %c16_i32_9 dim 1 : vector<8x256xf32>, i32 -> vector<8x256xf32>
    %c240_i32_10 = arith.constant 240 : i32
    %35 = tpu.dynamic_rotate %33 by %c240_i32_10 dim 1 : vector<8x256xf32>, i32 -> vector<8x256xf32>
    %36 = arith.select %11, %35, %34 : vector<8x256xi1>, vector<8x256xf32>
    %37 = arith.select %13, %36, %35 : vector<8x256xi1>, vector<8x256xf32>
    %38 = arith.addf %33, %36 : vector<8x256xf32>
    %39 = arith.addf %38, %37 : vector<8x256xf32>
    %cst_11 = arith.constant 0.111111112 : f32
    %40 = vector.broadcast %cst_11 : f32 to vector<8x256xf32>
    %41 = arith.mulf %39, %40 : vector<8x256xf32>
    %42 = arith.mulf %27, %41 : vector<8x256xf32>
    %43 = arith.mulf %27, %27 : vector<8x256xf32>
    %44 = arith.mulf %41, %41 : vector<8x256xf32>
    %45 = arith.addf %43, %44 : vector<8x256xf32>
    %46 = arith.mulf %0, %0 : vector<8x256xf32>
    %47 = arith.mulf %1, %1 : vector<8x256xf32>
    %48 = arith.addf %46, %47 : vector<8x256xf32>
    %c1_i32_12 = arith.constant 1 : i32
    %49 = tpu.dynamic_rotate %48 by %c1_i32_12 dim 1 : vector<8x256xf32>, i32 -> vector<8x256xf32>
    %c255_i32_13 = arith.constant 255 : i32
    %50 = tpu.dynamic_rotate %48 by %c255_i32_13 dim 1 : vector<8x256xf32>, i32 -> vector<8x256xf32>
    %51 = arith.select %7, %50, %49 : vector<8x256xi1>, vector<8x256xf32>
    %52 = arith.select %9, %51, %50 : vector<8x256xi1>, vector<8x256xf32>
    %53 = arith.addf %48, %51 : vector<8x256xf32>
    %54 = arith.addf %53, %52 : vector<8x256xf32>
    %c16_i32_14 = arith.constant 16 : i32
    %55 = tpu.dynamic_rotate %54 by %c16_i32_14 dim 1 : vector<8x256xf32>, i32 -> vector<8x256xf32>
    %c240_i32_15 = arith.constant 240 : i32
    %56 = tpu.dynamic_rotate %54 by %c240_i32_15 dim 1 : vector<8x256xf32>, i32 -> vector<8x256xf32>
    %57 = arith.select %11, %56, %55 : vector<8x256xi1>, vector<8x256xf32>
    %58 = arith.select %13, %57, %56 : vector<8x256xi1>, vector<8x256xf32>
    %59 = arith.addf %54, %57 : vector<8x256xf32>
    %60 = arith.addf %59, %58 : vector<8x256xf32>
    %cst_16 = arith.constant 0.111111112 : f32
    %61 = vector.broadcast %cst_16 : f32 to vector<8x256xf32>
    %62 = arith.mulf %60, %61 : vector<8x256xf32>
    %63 = arith.subf %62, %45 : vector<8x256xf32>
    %64 = arith.mulf %0, %1 : vector<8x256xf32>
    %c1_i32_17 = arith.constant 1 : i32
    %65 = tpu.dynamic_rotate %64 by %c1_i32_17 dim 1 : vector<8x256xf32>, i32 -> vector<8x256xf32>
    %c255_i32_18 = arith.constant 255 : i32
    %66 = tpu.dynamic_rotate %64 by %c255_i32_18 dim 1 : vector<8x256xf32>, i32 -> vector<8x256xf32>
    %67 = arith.select %7, %66, %65 : vector<8x256xi1>, vector<8x256xf32>
    %68 = arith.select %9, %67, %66 : vector<8x256xi1>, vector<8x256xf32>
    %69 = arith.addf %64, %67 : vector<8x256xf32>
    %70 = arith.addf %69, %68 : vector<8x256xf32>
    %c16_i32_19 = arith.constant 16 : i32
    %71 = tpu.dynamic_rotate %70 by %c16_i32_19 dim 1 : vector<8x256xf32>, i32 -> vector<8x256xf32>
    %c240_i32_20 = arith.constant 240 : i32
    %72 = tpu.dynamic_rotate %70 by %c240_i32_20 dim 1 : vector<8x256xf32>, i32 -> vector<8x256xf32>
    %73 = arith.select %11, %72, %71 : vector<8x256xi1>, vector<8x256xf32>
    %74 = arith.select %13, %73, %72 : vector<8x256xi1>, vector<8x256xf32>
    %75 = arith.addf %70, %73 : vector<8x256xf32>
    %76 = arith.addf %75, %74 : vector<8x256xf32>
    %cst_21 = arith.constant 0.111111112 : f32
    %77 = vector.broadcast %cst_21 : f32 to vector<8x256xf32>
    %78 = arith.mulf %76, %77 : vector<8x256xf32>
    %79 = arith.subf %78, %42 : vector<8x256xf32>
    %cst_22 = arith.constant 2.000000e+00 : f32
    %80 = vector.broadcast %cst_22 : f32 to vector<8x256xf32>
    %81 = arith.mulf %80, %42 : vector<8x256xf32>
    %cst_23 = arith.constant 9.99999974E-5 : f32
    %82 = vector.broadcast %cst_23 : f32 to vector<8x256xf32>
    %83 = arith.addf %81, %82 : vector<8x256xf32>
    %cst_24 = arith.constant 2.000000e+00 : f32
    %84 = vector.broadcast %cst_24 : f32 to vector<8x256xf32>
    %85 = arith.mulf %84, %79 : vector<8x256xf32>
    %cst_25 = arith.constant 8.99999984E-4 : f32
    %86 = vector.broadcast %cst_25 : f32 to vector<8x256xf32>
    %87 = arith.addf %85, %86 : vector<8x256xf32>
    %88 = arith.mulf %83, %87 : vector<8x256xf32>
    %cst_26 = arith.constant 9.99999974E-5 : f32
    %89 = vector.broadcast %cst_26 : f32 to vector<8x256xf32>
    %90 = arith.addf %45, %89 : vector<8x256xf32>
    %cst_27 = arith.constant 8.99999984E-4 : f32
    %91 = vector.broadcast %cst_27 : f32 to vector<8x256xf32>
    %92 = arith.addf %63, %91 : vector<8x256xf32>
    %93 = arith.mulf %90, %92 : vector<8x256xf32>
    %94 = tpu.reciprocal %93 {approx = true} : vector<8x256xf32> -> vector<8x256xf32>
    %95 = arith.mulf %93, %94 : vector<8x256xf32>
    %cst_28 = arith.constant 2.000000e+00 : f32
    %96 = vector.broadcast %cst_28 : f32 to vector<8x256xf32>
    %97 = arith.subf %96, %95 : vector<8x256xf32>
    %98 = arith.mulf %94, %97 : vector<8x256xf32>
    %99 = arith.mulf %88, %98 : vector<8x256xf32>
    %cst_29 = arith.constant 1.000000e+00 : f32
    %100 = vector.broadcast %cst_29 : f32 to vector<8x256xf32>
    %101 = arith.subf %100, %99 : vector<8x256xf32>
    %cst_30 = arith.constant 5.000000e-01 : f32
    %102 = vector.broadcast %cst_30 : f32 to vector<8x256xf32>
    %103 = arith.mulf %101, %102 : vector<8x256xf32>
    %cst_31 = arith.constant 0.000000e+00 : f32
    %cst_32 = arith.constant 1.000000e+00 : f32
    %104 = vector.broadcast %cst_31 : f32 to vector<8x256xf32>
    %105 = arith.maximumf %104, %103 : vector<8x256xf32>
    %106 = vector.broadcast %cst_32 : f32 to vector<8x256xf32>
    %107 = arith.minimumf %106, %105 : vector<8x256xf32>
    %c0_33 = arith.constant 0 : index
    %c0_34 = arith.constant 0 : index
    %108 = vector.load %arg4[%c0_33, %c0_34] : memref<8x256xf32, #tpu.memory_space<vmem>>, vector<8x256xf32>
    tpu.vector_store %arg4[%c0_33, %c0_34], %107 {strides = array<i32>} : memref<8x256xf32, #tpu.memory_space<vmem>>, vector<8x256xf32>,
    return
  }
  func.func @transform_0(%arg0: i32) -> (i32, i32) {
    %c0_i32 = arith.constant 0 : i32
    %c0_i32_0 = arith.constant 0 : i32
    %c0_i32_1 = arith.constant 0 : i32
    return %c0_i32, %c0_i32_0 : i32, i32
  }
  func.func @transform_1(%arg0: i32) -> (i32, i32) {
    %c0_i32 = arith.constant 0 : i32
    %c0_i32_0 = arith.constant 0 : i32
    return %arg0, %c0_i32 : i32, i32
  }
  func.func @transform_2(%arg0: i32) -> (i32, i32) {
    %c0_i32 = arith.constant 0 : i32
    %c0_i32_0 = arith.constant 0 : i32
    return %arg0, %c0_i32 : i32, i32
  }
  func.func @transform_3(%arg0: i32) -> (i32, i32) {
    %c0_i32 = arith.constant 0 : i32
    %c0_i32_0 = arith.constant 0 : i32
    return %arg0, %c0_i32 : i32, i32
  }
}

</mosaic_0001>

<llo_original>
// kernel: tpu_custom_call.1
$region0: #{tpu_custom_call.1}
  #allocation0 [shape = 'u32[]', space=smem, size = 0x4, offset = 0x4, fixed_abs, tag = 'smem constant byte address 0x4 - core index']
  #allocation1 [shape = 'u32[144,128]{1,0:T(1,128)}', space=vmem, size = 0x12000, scoped, tag = 'internal scratch']
  %s0 = inlined_call_operand.hbm [shape: s32[1,256], index: 0, kind: input, shape index: {}]
  %s1 = inlined_call_operand.hbm [shape: f32[8,256], index: 1, kind: input, shape index: {}]
  %s2 = inlined_call_operand.hbm [shape: f32[8,256], index: 2, kind: input, shape index: {}]
  %s3 = inlined_call_operand.hbm [shape: f32[8,256], index: 3, kind: output, shape index: {}]
  %s4 = sld [smem:[#allocation0]]
  $region34: #{tpu_custom_call.1} parent=0
    _
  %s6 = ssub.s32 1, %s4
  %s7 = scalar_select 0, %s6, %s4
  $region1: #{tpu_custom_call.1} parent=0
    #allocation2 [shape = 'u8[1024]{0}', space=vmem, size = 0x400, scoped, tag = 'input window, operand 0, single buffered']
    #allocation3 [shape = 's32[1]{0}', space=sflag, size = 0x4, scoped, tag = 'scoped memory for tpu_custom_call.1']
    #allocation4 [shape = 's32[1]{0}', space=sflag, size = 0x4, scoped, tag = 'scoped memory for tpu_custom_call.1']
    #allocation5 [shape = 'u8[8192]{0}', space=vmem, size = 0x2000, scoped, tag = 'input window, operand 1, single buffered']
    #allocation6 [shape = 's32[1]{0}', space=sflag, size = 0x4, scoped, tag = 'scoped memory for tpu_custom_call.1']
    #allocation7 [shape = 'u8[8192]{0}', space=vmem, size = 0x2000, scoped, tag = 'input window, operand 2, single buffered']
    #allocation8 [shape = 'u8[8192]{0}', space=vmem, size = 0x2000, scoped, tag = 'output window, operand 0, single buffered']
    %8 = vsyncpa [#allocation3], 0
    %9 = vsyncpa [#allocation6], 0
    %10 = vsyncpa [#allocation4], 0
    // Predicated region
    $region2: #{tpu_custom_call.1} parent=1 // pred_check
      _
    $region3: #{tpu_custom_call.1} parent=1 // pred_check_branch
      %12 = sbr.rel (0) target = $region5
    $region4: #{tpu_custom_call.1} parent=1 // pred_region
      %s14 = ssub.s32 32, 32
      %15 = vsyncadd [#allocation3], %s14
      %s17 = sshll.u32 [#allocation2], 4
      %s18 = int_to_ptr.vmem [resolvable:$true] %s17
      %20 = dma.hbm_to_vmem [thread:$0]  %s0, 32, %s18, [#allocation3]
    $region5: #{tpu_custom_call.1} parent=1 // pred_fallthru
      _
    // Predicated region
    $region6: #{tpu_custom_call.1} parent=1 // pred_check
      _
    $region7: #{tpu_custom_call.1} parent=1 // pred_check_branch
      %22 = sbr.rel (0) target = $region9
    $region8: #{tpu_custom_call.1} parent=1 // pred_region
      %s24 = ssub.s32 256, 256
      %25 = vsyncadd [#allocation6], %s24
      %s27 = sshll.u32 [#allocation5], 4
      %s28 = int_to_ptr.vmem [resolvable:$true] %s27
      %30 = dma.hbm_to_vmem [thread:$0]  %s1, 256, %s28, [#allocation6]
    $region9: #{tpu_custom_call.1} parent=1 // pred_fallthru
      _
    // Predicated region
    $region10: #{tpu_custom_call.1} parent=1 // pred_check
      _
    $region11: #{tpu_custom_call.1} parent=1 // pred_check_branch
      %32 = sbr.rel (0) target = $region13
    $region12: #{tpu_custom_call.1} parent=1 // pred_region
      %s34 = ssub.s32 256, 256
      %35 = vsyncadd [#allocation6], %s34
      %s37 = sshll.u32 [#allocation7], 4
      %s38 = int_to_ptr.vmem [resolvable:$true] %s37
      %40 = dma.hbm_to_vmem [thread:$0]  %s2, 256, %s38, [#allocation6]
    $region13: #{tpu_custom_call.1} parent=1 // pred_fallthru
      _
    // Predicated region
    $region14: #{tpu_custom_call.1} parent=1 // pred_check
      _
    $region15: #{tpu_custom_call.1} parent=1 // pred_check_branch
      %42 = sbr.rel (0) target = $region17
    $region16: #{tpu_custom_call.1} parent=1 // pred_region
      %43 = dma.done [#allocation3], 32
    $region17: #{tpu_custom_call.1} parent=1 // pred_fallthru
      _
    // Predicated region
    $region18: #{tpu_custom_call.1} parent=1 // pred_check
      _
    $region19: #{tpu_custom_call.1} parent=1 // pred_check_branch
      %45 = sbr.rel (0) target = $region21
    $region20: #{tpu_custom_call.1} parent=1 // pred_region
      %46 = dma.done [#allocation6], 256
    $region21: #{tpu_custom_call.1} parent=1 // pred_fallthru
      _
    // Predicated region
    $region22: #{tpu_custom_call.1} parent=1 // pred_check
      _
    $region23: #{tpu_custom_call.1} parent=1 // pred_check_branch
      %48 = sbr.rel (0) target = $region25
    $region24: #{tpu_custom_call.1} parent=1 // pred_region
      %49 = dma.done [#allocation6], 256
    $region25: #{tpu_custom_call.1} parent=1 // pred_fallthru
      _
    %v50 = vld [vmem:[#allocation5] sm:$0xff]
    %v51 = vld [vmem:[#allocation5 + $0x8] sm:$0xff]
    %v52 = vld [vmem:[#allocation7] sm:$0xff]
    %v53 = vld [vmem:[#allocation7 + $0x8] sm:$0xff]
    %v54 = vld [vmem:[#allocation2] sm:$0x3]
    %v55 = vlaneseq
    %v56 = vshrl.u32 %v55, 7
    %v57 = vsub.s32 0, %v56
    %v58 = vrot.slane %v54, %v57
    %v59 = vlaneseq
    %v60 = vshrl.u32 %v59, 7
    %v61 = vsub.s32 1, %v60
    %v62 = vrot.slane %v54, %v61
    %v63 = vlaneseq
    %v64 = vand.u32 %v63, 127
    %v65 = vadd.s32 %v64, 128
    %vm66 = vcmp.eq.s32.totalorder %v58, 0
    %vm67 = vcmp.eq.s32.totalorder %v62, 0
    %vm68 = vcmp.eq.s32.totalorder %v58, 15
    %vm69 = vcmp.eq.s32.totalorder %v62, 15
    %vm70 = vcmp.lt.s32.totalorder %v64, 16
    %vm71 = vcmp.lt.s32.totalorder %v65, 16
    %vm72 = vcmp.ge.s32.totalorder %v64, 240
    %vm73 = vcmp.ge.s32.totalorder %v65, 240
    %74 = vrot.lane.b32.xlu0 %v50, 1
    %v75 = vpop.permute.xlu0 %74
    %76 = vrot.lane.b32.xlu0 %v51, 1
    %v77 = vpop.permute.xlu0 %76
    %vm78 = vcmp.lt.s32.totalorder %v64, 1
    %v79 = vsel %vm78, %v75, %v77
    %v80 = vsel %vm78, %v77, %v75
    %81 = vrot.lane.b32.xlu0 %v50, 127
    %v82 = vpop.permute.xlu0 %81
    %83 = vrot.lane.b32.xlu0 %v51, 127
    %v84 = vpop.permute.xlu0 %83
    %vm85 = vcmp.lt.s32.totalorder %v64, 127
    %v86 = vsel %vm85, %v82, %v84
    %v87 = vsel %vm85, %v84, %v82
    %v88 = vsel %vm66, %v86, %v80
    %v89 = vsel %vm67, %v87, %v79
    %v90 = vsel %vm68, %v88, %v86
    %v91 = vsel %vm69, %v89, %v87
    %v92 = vadd.f32 %v50, %v88
    %v93 = vadd.f32 %v51, %v89
    %v94 = vadd.f32 %v92, %v90
    %v95 = vadd.f32 %v93, %v91
    %96 = vrot.lane.b32.xlu0 %v94, 16
    %v97 = vpop.permute.xlu0 %96
    %98 = vrot.lane.b32.xlu0 %v95, 16
    %v99 = vpop.permute.xlu0 %98
    %v100 = vsel %vm70, %v97, %v99
    %v101 = vsel %vm70, %v99, %v97
    %102 = vrot.lane.b32.xlu0 %v94, 112
    %v103 = vpop.permute.xlu0 %102
    %104 = vrot.lane.b32.xlu0 %v95, 112
    %v105 = vpop.permute.xlu0 %104
    %vm106 = vcmp.lt.s32.totalorder %v64, 112
    %v107 = vsel %vm106, %v103, %v105
    %v108 = vsel %vm106, %v105, %v103
    %v109 = vsel %vm70, %v107, %v101
    %v110 = vsel %vm71, %v108, %v100
    %v111 = vsel %vm72, %v109, %v107
    %v112 = vsel %vm73, %v110, %v108
    %v113 = vadd.f32 %v94, %v109
    %v114 = vadd.f32 %v95, %v110
    %v115 = vadd.f32 %v113, %v111
    %v116 = vadd.f32 %v114, %v112
    %v117 = vmul.f32 %v115, 0.11111111
    %v118 = vmul.f32 %v116, 0.11111111
    %119 = vrot.lane.b32.xlu0 %v52, 1
    %v120 = vpop.permute.xlu0 %119
    %121 = vrot.lane.b32.xlu0 %v53, 1
    %v122 = vpop.permute.xlu0 %121
    %v123 = vsel %vm78, %v120, %v122
    %v124 = vsel %vm78, %v122, %v120
    %125 = vrot.lane.b32.xlu0 %v52, 127
    %v126 = vpop.permute.xlu0 %125
    %127 = vrot.lane.b32.xlu0 %v53, 127
    %v128 = vpop.permute.xlu0 %127
    %v129 = vsel %vm85, %v126, %v128
    %v130 = vsel %vm85, %v128, %v126
    %v131 = vsel %vm66, %v129, %v124
    %v132 = vsel %vm67, %v130, %v123
    %v133 = vsel %vm68, %v131, %v129
    %v134 = vsel %vm69, %v132, %v130
    %v135 = vadd.f32 %v52, %v131
    %v136 = vadd.f32 %v53, %v132
    %v137 = vadd.f32 %v135, %v133
    %v138 = vadd.f32 %v136, %v134
    %139 = vrot.lane.b32.xlu0 %v137, 16
    %v140 = vpop.permute.xlu0 %139
    %141 = vrot.lane.b32.xlu0 %v138, 16
    %v142 = vpop.permute.xlu0 %141
    %v143 = vsel %vm70, %v140, %v142
    %v144 = vsel %vm70, %v142, %v140
    %145 = vrot.lane.b32.xlu0 %v137, 112
    %v146 = vpop.permute.xlu0 %145
    %147 = vrot.lane.b32.xlu0 %v138, 112
    %v148 = vpop.permute.xlu0 %147
    %v149 = vsel %vm106, %v146, %v148
    %v150 = vsel %vm106, %v148, %v146
    %v151 = vsel %vm70, %v149, %v144
    %v152 = vsel %vm71, %v150, %v143
    %v153 = vsel %vm72, %v151, %v149
    %v154 = vsel %vm73, %v152, %v150
    %v155 = vadd.f32 %v137, %v151
    %v156 = vadd.f32 %v138, %v152
    %v157 = vadd.f32 %v155, %v153
    %v158 = vadd.f32 %v156, %v154
    %v159 = vmul.f32 %v157, 0.11111111
    %v160 = vmul.f32 %v158, 0.11111111
    %v161 = vmul.f32 %v117, %v159
    %v162 = vmul.f32 %v118, %v160
    %v163 = vmul.f32 %v117, %v117
    %v164 = vmul.f32 %v118, %v118
    %v165 = vmul.f32 %v159, %v159
    %v166 = vmul.f32 %v160, %v160
    %v167 = vadd.f32 %v163, %v165
    %v168 = vadd.f32 %v164, %v166
    %v169 = vmul.f32 %v50, %v50
    %v170 = vmul.f32 %v51, %v51
    %v171 = vmul.f32 %v52, %v52
    %v172 = vmul.f32 %v53, %v53
    %v173 = vadd.f32 %v169, %v171
    %v174 = vadd.f32 %v170, %v172
    %175 = vrot.lane.b32.xlu0 %v173, 1
    %v176 = vpop.permute.xlu0 %175
    %177 = vrot.lane.b32.xlu0 %v174, 1
    %v178 = vpop.permute.xlu0 %177
    %v179 = vsel %vm78, %v176, %v178
    %v180 = vsel %vm78, %v178, %v176
    %181 = vrot.lane.b32.xlu0 %v173, 127
    %v182 = vpop.permute.xlu0 %181
    %183 = vrot.lane.b32.xlu0 %v174, 127
    %v184 = vpop.permute.xlu0 %183
    %v185 = vsel %vm85, %v182, %v184
    %v186 = vsel %vm85, %v184, %v182
    %v187 = vsel %vm66, %v185, %v180
    %v188 = vsel %vm67, %v186, %v179
    %v189 = vsel %vm68, %v187, %v185
    %v190 = vsel %vm69, %v188, %v186
    %v191 = vadd.f32 %v173, %v187
    %v192 = vadd.f32 %v174, %v188
    %v193 = vadd.f32 %v191, %v189
    %v194 = vadd.f32 %v192, %v190
    %195 = vrot.lane.b32.xlu0 %v193, 16
    %v196 = vpop.permute.xlu0 %195
    %197 = vrot.lane.b32.xlu0 %v194, 16
    %v198 = vpop.permute.xlu0 %197
    %v199 = vsel %vm70, %v196, %v198
    %v200 = vsel %vm70, %v198, %v196
    %201 = vrot.lane.b32.xlu0 %v193, 112
    %v202 = vpop.permute.xlu0 %201
    %203 = vrot.lane.b32.xlu0 %v194, 112
    %v204 = vpop.permute.xlu0 %203
    %v205 = vsel %vm106, %v202, %v204
    %v206 = vsel %vm106, %v204, %v202
    %v207 = vsel %vm70, %v205, %v200
    %v208 = vsel %vm71, %v206, %v199
    %v209 = vsel %vm72, %v207, %v205
    %v210 = vsel %vm73, %v208, %v206
    %v211 = vadd.f32 %v193, %v207
    %v212 = vadd.f32 %v194, %v208
    %v213 = vadd.f32 %v211, %v209
    %v214 = vadd.f32 %v212, %v210
    %v215 = vmul.f32 %v213, 0.11111111
    %v216 = vmul.f32 %v214, 0.11111111
    %v217 = vsub.f32 %v215, %v167
    %v218 = vsub.f32 %v216, %v168
    %v219 = vmul.f32 %v50, %v52
    %v220 = vmul.f32 %v51, %v53
    %221 = vrot.lane.b32.xlu0 %v219, 1
    %v222 = vpop.permute.xlu0 %221
    %223 = vrot.lane.b32.xlu0 %v220, 1
    %v224 = vpop.permute.xlu0 %223
    %v225 = vsel %vm78, %v222, %v224
    %v226 = vsel %vm78, %v224, %v222
    %227 = vrot.lane.b32.xlu0 %v219, 127
    %v228 = vpop.permute.xlu0 %227
    %229 = vrot.lane.b32.xlu0 %v220, 127
    %v230 = vpop.permute.xlu0 %229
    %v231 = vsel %vm85, %v228, %v230
    %v232 = vsel %vm85, %v230, %v228
    %v233 = vsel %vm66, %v231, %v226
    %v234 = vsel %vm67, %v232, %v225
    %v235 = vsel %vm68, %v233, %v231
    %v236 = vsel %vm69, %v234, %v232
    %v237 = vadd.f32 %v219, %v233
    %v238 = vadd.f32 %v220, %v234
    %v239 = vadd.f32 %v237, %v235
    %v240 = vadd.f32 %v238, %v236
    %241 = vrot.lane.b32.xlu0 %v239, 16
    %v242 = vpop.permute.xlu0 %241
    %243 = vrot.lane.b32.xlu0 %v240, 16
    %v244 = vpop.permute.xlu0 %243
    %v245 = vsel %vm70, %v242, %v244
    %v246 = vsel %vm70, %v244, %v242
    %247 = vrot.lane.b32.xlu0 %v239, 112
    %v248 = vpop.permute.xlu0 %247
    %249 = vrot.lane.b32.xlu0 %v240, 112
    %v250 = vpop.permute.xlu0 %249
    %v251 = vsel %vm106, %v248, %v250
    %v252 = vsel %vm106, %v250, %v248
    %v253 = vsel %vm70, %v251, %v246
    %v254 = vsel %vm71, %v252, %v245
    %v255 = vsel %vm72, %v253, %v251
    %v256 = vsel %vm73, %v254, %v252
    %v257 = vadd.f32 %v239, %v253
    %v258 = vadd.f32 %v240, %v254
    %v259 = vadd.f32 %v257, %v255
    %v260 = vadd.f32 %v258, %v256
    %v261 = vmul.f32 %v259, 0.11111111
    %v262 = vmul.f32 %v260, 0.11111111
    %v263 = vsub.f32 %v261, %v161
    %v264 = vsub.f32 %v262, %v162
    %v265 = vmul.f32 %v161, 2.0
    %v266 = vmul.f32 %v162, 2.0
    %v267 = vadd.f32 %v265, 0.0001
    %v268 = vadd.f32 %v266, 0.0001
    %v269 = vmul.f32 %v263, 2.0
    %v270 = vmul.f32 %v264, 2.0
    %v271 = vadd.f32 %v269, 0.0009
    %v272 = vadd.f32 %v270, 0.0009
    %v273 = vmul.f32 %v267, %v271
    %v274 = vmul.f32 %v268, %v272
    %v275 = vadd.f32 %v167, 0.0001
    %v276 = vadd.f32 %v168, 0.0001
    %v277 = vadd.f32 %v217, 0.0009
    %v278 = vadd.f32 %v218, 0.0009
    %v279 = vmul.f32 %v275, %v277
    %v280 = vmul.f32 %v276, %v278
    %v281 = vrcp.pop %v279
    %v282 = vrcp.pop %v280
    %v283 = vmul.f32 %v279, %v281
    %v284 = vmul.f32 %v280, %v282
    %v285 = vsub.f32 2.0, %v283
    %v286 = vsub.f32 2.0, %v284
    %v287 = vmul.f32 %v281, %v285
    %v288 = vmul.f32 %v282, %v286
    %v289 = vmul.f32 %v273, %v287
    %v290 = vmul.f32 %v274, %v288
    %v291 = vsub.f32 1.0, %v289
    %v292 = vsub.f32 1.0, %v290
    %v293 = vmul.f32 %v291, 0.5
    %v294 = vmul.f32 %v292, 0.5
    %v295 = vmax.f32 %v293, 0.0
    %v296 = vmax.f32 %v294, 0.0
    %v297 = vmin.f32 %v295, 1.0
    %v298 = vmin.f32 %v296, 1.0
    %299 = vst [vmem:[#allocation8] sm:$0xff] %v297
    %300 = vst [vmem:[#allocation8 + $0x8] sm:$0xff] %v298
    // Predicated region
    $region26: #{tpu_custom_call.1} parent=1 // pred_check
      _
    $region27: #{tpu_custom_call.1} parent=1 // pred_check_branch
      %302 = sbr.rel (0) target = $region29
    $region28: #{tpu_custom_call.1} parent=1 // pred_region
      %s304 = ssub.s32 256, 256
      %305 = vsyncadd [#allocation4], %s304
      %s307 = sshll.u32 [#allocation8], 4
      %s308 = int_to_ptr.vmem [resolvable:$true] %s307
      %310 = dma.vmem_to_hbm [thread:$0]  %s308, 256, %s3, [#allocation4]
    $region29: #{tpu_custom_call.1} parent=1 // pred_fallthru
      _
    // Predicated region
    $region30: #{tpu_custom_call.1} parent=1 // pred_check
      _
    $region31: #{tpu_custom_call.1} parent=1 // pred_check_branch
      %312 = sbr.rel (0) target = $region33
    $region32: #{tpu_custom_call.1} parent=1 // pred_region
      %313 = dma.done [#allocation4], 256
    $region33: #{tpu_custom_call.1} parent=1 // pred_fallthru
      _
    %314 = vsyncpa [#allocation3], 1
    %315 = vsyncpa [#allocation6], 1
    %316 = vsyncpa [#allocation4], 1

</llo_original>
